<compile_context>
chip_gen: v7x
topology: tpu7x:2x2x1
jax: 0.10.0
libtpu: 0.0.40
codegen_flags: <defaults>
</compile_context>

<pallas_src>
import jax
import jax.numpy as jnp
from jax.experimental import pallas as pl
from jax.experimental.pallas import tpu as pltpu

PAD_IDX, START_IDX, END_IDX = 0, 1, 2


def _round_up(x, m):
    return (x + m - 1) // m * m


# ----------------------------------------------------------------------------
# Kernel 1: generic tiled linear  out = x @ w + b   (classifier & hoisted projections)
# ----------------------------------------------------------------------------
def _linear_kernel(x_ref, w_ref, b_ref, o_ref):
    o_ref[...] = (jnp.dot(x_ref[...], w_ref[...],
                          preferred_element_type=jnp.float32) + b_ref[...])


def linear_tiled(x, w, b, *, tm=256, tn=512):
    """x:[M,K] (bf16/f32), w:[K,Nf] (bf16/f32), b:[1,Nf] f32 -> [M,Nf] f32."""
    M, K = x.shape
    Nf = w.shape[1]
    tm = min(tm, _round_up(M, 8))
    tn = min(tn, _round_up(Nf, 128))
    Mp, Np = _round_up(M, tm), _round_up(Nf, tn)
    if Mp != M:
        x = jnp.pad(x, ((0, Mp - M), (0, 0)))
    if Np != Nf:
        w = jnp.pad(w, ((0, 0), (0, Np - Nf)))
        b = jnp.pad(b, ((0, 0), (0, Np - Nf)))
    out = pl.pallas_call(
        _linear_kernel,
        out_shape=jax.ShapeDtypeStruct((Mp, Np), jnp.float32),
        grid=(Mp // tm, Np // tn),
        in_specs=[pl.BlockSpec((tm, K), lambda i, j: (i, 0)),
                  pl.BlockSpec((K, tn), lambda i, j: (0, j)),
                  pl.BlockSpec((1, tn), lambda i, j: (0, j))],
        out_specs=pl.BlockSpec((tm, tn), lambda i, j: (i, j)),
        compiler_params=pltpu.CompilerParams(
            dimension_semantics=("parallel", "parallel"),
            vmem_limit_bytes=32 * 1024 * 1024),
    )(x, w, b)
    return out[:M, :Nf]


# ----------------------------------------------------------------------------
# Kernel 2: encoder — 2D projection matmul + masked mean pooling (mask pre-normalized)
# ----------------------------------------------------------------------------
def _encoder_kernel(feats_ref, w_ref, b_ref, maskn_ref, emb_ref, pooled_ref):
    emb2 = jnp.dot(feats_ref[...], w_ref[...],
                   preferred_element_type=jnp.float32) + b_ref[...]   # [N*T, E]
    emb_ref[...] = emb2
    N, T = maskn_ref.shape
    E = w_ref.shape[1]
    emb3 = emb2.reshape(N, T, E)
    # maskn already contains mask / clamp(len, 1): pooled = sum_t maskn * emb
    pooled_ref[...] = jnp.sum(emb3 * maskn_ref[...][:, :, None], axis=1)


def encoder_forward(feats, feat_lens, w_enc, b_enc):
    # TODO(synk): tile over N*T (reuse linear_tiled + gridded pooling) for large inputs;
    # full-array blocks are fine at these sizes.
    N, T, F = feats.shape
    E = w_enc.shape[1]
    mask = (jnp.arange(T)[None, :] < feat_lens[:, None]).astype(jnp.float32)
    denom = jnp.maximum(jnp.sum(mask, axis=1, keepdims=True), 1.0)   # no NaN if len==0
    mask_norm = mask / denom
    feats2d = feats.reshape(N * T, F).astype(jnp.bfloat16)
    emb_flat, pooled = pl.pallas_call(
        _encoder_kernel,
        out_shape=(jax.ShapeDtypeStruct((N * T, E), jnp.float32),
                   jax.ShapeDtypeStruct((N, E), jnp.float32)),
        in_specs=[pl.BlockSpec((N * T, F), lambda: (0, 0)),
                  pl.BlockSpec((F, E), lambda: (0, 0)),
                  pl.BlockSpec((1, E), lambda: (0, 0)),
                  pl.BlockSpec((N, T), lambda: (0, 0))],
        out_specs=(pl.BlockSpec((N * T, E), lambda: (0, 0)),
                   pl.BlockSpec((N, E), lambda: (0, 0))),
    )(feats2d, w_enc.astype(jnp.bfloat16), b_enc, mask_norm)
    return {
        "audio_embeds": emb_flat.reshape(N, T, E),
        "audio_embeds_pooled": pooled,
        "state": pooled[None],                # [1, N, H]  (H == E)
        "audio_embeds_lens": feat_lens,
    }


# ----------------------------------------------------------------------------
# Kernel 3: GRU recurrence with hoisted/fused gates.
#   mem  = pooled @ W_ih_mem + (b_ih + [b_hr|b_hz|0])   (computed once at t==0, VMEM-resident)
#   gx   = xproj(t) + mem                                (input proj hoisted outside)
#   rec  = h @ W_hh                                      (single fused [N,H]@[H,3H] per step)
#   r = sig(gx_r + rec_r); z = sig(gx_z + rec_z); n = tanh(gx_n + r*(rec_n + b_hn))
#   h' = (1-z)*n + z*h                                   (PyTorch nn.GRU semantics)
# ----------------------------------------------------------------------------
def _gru_kernel(xproj_ref, h0_ref, wmem_ref, bfused_ref, whh_ref, bhn_ref,
                out_ref, state_ref, h_scratch, mem_scratch):
    t = pl.program_id(0)
    H = h0_ref.shape[1]

    @pl.when(t == 0)
    def _():
        h_scratch[...] = h0_ref[...]
        mem_scratch[...] = (
            jnp.dot(h0_ref[...].astype(wmem_ref.dtype), wmem_ref[...],
                    preferred_element_type=jnp.float32) + bfused_ref[...])

    h = h_scratch[...]                                    # [N, H]  f32
    gx = xproj_ref[0] + mem_scratch[...]                  # [N, 3H] f32
    rec = jnp.dot(h.astype(whh_ref.dtype), whh_ref[...],
                  preferred_element_type=jnp.float32)     # [N, 3H] f32
    r = jax.nn.sigmoid(gx[:, :H] + rec[:, :H])
    z = jax.nn.sigmoid(gx[:, H:2 * H] + rec[:, H:2 * H])
    n = jnp.tanh(gx[:, 2 * H:] + r * (rec[:, 2 * H:] + bhn_ref[...]))
    h_new = (1.0 - z) * n + z * h

    h_scratch[...] = h_new
    out_ref[0] = h_new

    @pl.when(t == pl.num_programs(0) - 1)
    def _():
        state_ref[...] = h_new


def gru_forward(x_proj, h0, w_ih_mem, b_fused, w_hh, b_hn):
    # x_proj:[L,N,3H] time-major word projection (no bias), h0:[N,H] f32 (pooled),
    # w_ih_mem:[E,3H] bf16, b_fused:[1,3H] f32, w_hh:[H,3H] bf16, b_hn:[1,H] f32.
    L, N, G = x_proj.shape
    H = h0.shape[1]
    E = w_ih_mem.shape[0]
    outputs, state = pl.pallas_call(
        _gru_kernel,
        grid=(L,),
        out_shape=(jax.ShapeDtypeStruct((L, N, H), jnp.float32),
                   jax.ShapeDtypeStruct((N, H), jnp.float32)),
        in_specs=[pl.BlockSpec((1, N, G), lambda t: (t, 0, 0)),
                  pl.BlockSpec((N, H), lambda t: (0, 0)),
                  pl.BlockSpec((E, G), lambda t: (0, 0)),
                  pl.BlockSpec((1, G), lambda t: (0, 0)),
                  pl.BlockSpec((H, G), lambda t: (0, 0)),
                  pl.BlockSpec((1, H), lambda t: (0, 0))],
        out_specs=(pl.BlockSpec((1, N, H), lambda t: (t, 0, 0)),
                   pl.BlockSpec((N, H), lambda t: (0, 0))),
        scratch_shapes=[pltpu.VMEM((N, H), jnp.float32),
                        pltpu.VMEM((N, G), jnp.float32)],
        compiler_params=pltpu.CompilerParams(dimension_semantics=("arbitrary",)),
    )(x_proj, h0, w_ih_mem, b_fused, w_hh, b_hn)
    return outputs, state


# ----------------------------------------------------------------------------
# CaptionModel forward (train path: 4 inputs -> teacher forcing, ss_ratio == 1)
# ----------------------------------------------------------------------------
class CaptionModelPallas:
    def __init__(self, feat_dim, emb_size, hidden_size, vocab_size, key):
        assert emb_size == hidden_size, "pooled embedding is used as GRU init state"
        self.vocab_size = vocab_size
        self.hidden_size = hidden_size
        self.emb_size = emb_size
        ks = jax.random.split(key, 10)
        s = 0.1
        self.params = {
            "w_enc": jax.random.normal(ks[0], (feat_dim, emb_size), jnp.float32) * s,
            "b_enc": jax.random.normal(ks[5], (1, emb_size), jnp.float32) * s,
            "word_emb": jax.random.normal(ks[1], (vocab_size, emb_size), jnp.float32) * s,
            # fused gate layout: columns are [r | z | n]; rows are [word part | enc_mem part]
            "w_ih": jax.random.normal(ks[2], (2 * emb_size, 3 * hidden_size), jnp.float32) * s,
            "w_hh": jax.random.normal(ks[3], (hidden_size, 3 * hidden_size), jnp.float32) * s,
            "b_ih": jax.random.normal(ks[6], (1, 3 * hidden_size), jnp.float32) * s,
            "b_hh": jax.random.normal(ks[7], (1, 3 * hidden_size), jnp.float32) * s,
            "w_cls": jax.random.normal(ks[4], (hidden_size, vocab_size), jnp.float32) * s,
            "b_cls": jax.random.normal(ks[8], (1, vocab_size), jnp.float32) * s,
        }

    def __call__(self, feats, feat_lens, caps, cap_lens):
        p = self.params
        bf16 = jnp.bfloat16
        E, H = self.emb_size, self.hidden_size

        encoded = encoder_forward(feats, feat_lens, p["w_enc"], p["b_enc"])
        pooled = encoded["audio_embeds_pooled"]            # [N, E]

        N = feats.shape[0]
        L = caps.shape[1] - 1                              # decode length

        # prepare_output placeholders
        output = {
            "seqs": jnp.full((N, L), END_IDX, dtype=jnp.int32),
            "sampled_logprobs": jnp.zeros((N, L), jnp.float32),
        }

        # ---- hoisted, time-invariant pieces ---------------------------------
        w_ih_word, w_ih_mem = p["w_ih"][:E], p["w_ih"][E:]
        # fold b_ih (all gates) + b_hr/b_hz into the enc_mem term; b_hn stays in-step
        b_fused = p["b_ih"] + jnp.concatenate(
            [p["b_hh"][:, :2 * H], jnp.zeros((1, H), jnp.float32)], axis=1)
        b_hn = p["b_hh"][:, 2 * H:]

        # word-input projection hoisted out of the recurrence, built time-major
        # directly (only the tiny int32 index matrix is transposed).
        words_tm = caps[:, :-1].T                                  # [L, N]
        w_emb_tm = jnp.take(p["word_emb"], words_tm, axis=0)       # [L, N, E]
        xproj_flat = linear_tiled(w_emb_tm.reshape(L * N, E).astype(bf16),
                                  w_ih_word.astype(bf16),
                                  jnp.zeros((1, 3 * H), jnp.float32))
        x_proj = xproj_flat.reshape(L, N, 3 * H)                   # [L, N, 3H]

        # ---- serial GRU (enc_mem proj fused into t==0, [N,H]@[H,3H] per step) ----
        outputs_tm, final_state = gru_forward(
            x_proj, pooled, w_ih_mem.astype(bf16), b_fused,
            p["w_hh"].astype(bf16), b_hn)
        dec_out = jnp.transpose(outputs_tm, (1, 0, 2))             # [N, L, H] (small)

        # ---- tiled vocab classifier -----------------------------------------
        logits_flat = linear_tiled(dec_out.reshape(N * L, H).astype(bf16),
                                   p["w_cls"].astype(bf16), p["b_cls"])
        logits = logits_flat.reshape(N, L, self.vocab_size)

        decoder_output = {
            "logits": logits,                 # [N, L, V]
            "output": dec_out,                # [N, L, H]
            "states": final_state[None],      # [1, N, H]
        }
        output.update(decoder_output)         # train_process
        return output


# ----------------------------------------------------------------------------
# Pure-JAX reference (float32) for correctness checking
# ----------------------------------------------------------------------------
def _reference_forward(p, feats, feat_lens, caps):
    N, T, F = feats.shape
    E = p["w_enc"].shape[1]
    H = E
    emb = feats @ p["w_enc"] + p["b_enc"]                       # [N,T,E]
    mask = (jnp.arange(T)[None, :] < feat_lens[:, None]).astype(jnp.float32)
    denom = jnp.maximum(mask.sum(1, keepdims=True), 1.0)
    pooled = (emb * mask[:, :, None]).sum(1) / denom            # [N,E]
    words = caps[:, :-1]
    L = words.shape[1]
    wemb = p["word_emb"][words]                                  # [N,L,E]
    b_ih, b_hh = p["b_ih"][0], p["b_hh"][0]
    h = pooled
    outs = []
    for t in range(L):
        x = jnp.concatenate([wemb[:, t], pooled], axis=1)        # [N,2E]
        gi = x @ p["w_ih"] + b_ih
        gh = h @ p["w_hh"] + b_hh
        r = jax.nn.sigmoid(gi[:, :H] + gh[:, :H])
        z = jax.nn.sigmoid(gi[:, H:2 * H] + gh[:, H:2 * H])
        n = jnp.tanh(gi[:, 2 * H:] + r * gh[:, 2 * H:])
        h = (1.0 - z) * n + z * h
        outs.append(h)
    out = jnp.stack(outs, axis=1)                                # [N,L,H]
    logits = out @ p["w_cls"] + p["b_cls"]                       # [N,L,V]
    return out, logits, h


if __name__ == "__main__":
    key = jax.random.PRNGKey(0)
    k_model, k_feat, k_cap = jax.random.split(key, 3)

    N, T, F = 2, 8, 16
    E = H = 32
    V = 128
    CAP_LEN = 6

    model = CaptionModelPallas(feat_dim=F, emb_size=E, hidden_size=H,
                               vocab_size=V, key=k_model)

    feats = jax.random.normal(k_feat, (N, T, F), jnp.float32)
    feat_lens = jnp.array([8, 5], jnp.int32)
    caps = jax.random.randint(k_cap, (N, CAP_LEN), 3, V).astype(jnp.int32)
    caps = caps.at[:, 0].set(START_IDX)
    cap_lens = jnp.array([CAP_LEN, CAP_LEN], jnp.int32)

    out = model(feats, feat_lens, caps, cap_lens)
    jax.block_until_ready(out)

    assert out["logits"].shape == (N, CAP_LEN - 1, V)
    assert out["output"].shape == (N, CAP_LEN - 1, H)
    assert out["states"].shape == (1, N, H)
    assert bool(jnp.all(jnp.isfinite(out["logits"])))

    # numeric check against a float32 JAX reference (kernel uses bf16 MXU feeds)
    ref_out, ref_logits, ref_state = _reference_forward(
        model.params, feats, feat_lens, caps)
    assert float(jnp.max(jnp.abs(out["output"] - ref_out))) < 5e-2
    assert float(jnp.max(jnp.abs(out["logits"] - ref_logits))) < 5e-2
    assert float(jnp.max(jnp.abs(out["states"][0] - ref_state))) < 5e-2

    print("KERNEL_OK")
</pallas_src>

<mosaic_0001>
module attributes {stable_mosaic.version = 11 : i64} {
  func.func @_encoder_kernel(%arg0: memref<16x16xbf16, #tpu.memory_space<vmem>>, %arg1: memref<16x32xbf16, #tpu.memory_space<vmem>>, %arg2: memref<1x32xf32, #tpu.memory_space<vmem>>, %arg3: memref<2x8xf32, #tpu.memory_space<vmem>>, %arg4: memref<16x32xf32, #tpu.memory_space<vmem>>, %arg5: memref<2x32xf32, #tpu.memory_space<vmem>>) attributes {dimension_semantics = [], scalar_prefetch = 0 : i64, scratch_operands = 0 : i64, tpu.core_type = #tpu.core_type<tc>} {
    %c0 = arith.constant 0 : index
    %c0_0 = arith.constant 0 : index
    %0 = vector.load %arg0[%c0, %c0_0] : memref<16x16xbf16, #tpu.memory_space<vmem>>, vector<16x16xbf16>
    %c0_1 = arith.constant 0 : index
    %c0_2 = arith.constant 0 : index
    %1 = vector.load %arg1[%c0_1, %c0_2] : memref<16x32xbf16, #tpu.memory_space<vmem>>, vector<16x32xbf16>
    %cst = arith.constant dense<0.000000e+00> : vector<16x32xf32>
    %2 = tpu.matmul %0, %1, %cst {dimension_numbers = #tpu.dot_dimension_numbers<[1], [0], [0], [1], [0, 0, 1, 1], [], []>} : vector<16x16xbf16>, vector<16x32xbf16>, vector<16x32xf32> -> vector<16x32xf32>
    %c0_3 = arith.constant 0 : index
    %c0_4 = arith.constant 0 : index
    %3 = vector.load %arg2[%c0_3, %c0_4] : memref<1x32xf32, #tpu.memory_space<vmem>>, vector<1x32xf32>
    %4 = vector.broadcast %3 : vector<1x32xf32> to vector<16x32xf32>
    %5 = arith.addf %2, %4 : vector<16x32xf32>
    %c0_5 = arith.constant 0 : index
    %c0_6 = arith.constant 0 : index
    %6 = vector.load %arg4[%c0_5, %c0_6] : memref<16x32xf32, #tpu.memory_space<vmem>>, vector<16x32xf32>
    tpu.vector_store %arg4[%c0_5, %c0_6], %5 {strides = array<i32>} : memref<16x32xf32, #tpu.memory_space<vmem>>, vector<16x32xf32>,
    %7 = vector.shape_cast %5 : vector<16x32xf32> to vector<2x8x32xf32>
    %c0_7 = arith.constant 0 : index
    %c0_8 = arith.constant 0 : index
    %8 = vector.load %arg3[%c0_7, %c0_8] : memref<2x8xf32, #tpu.memory_space<vmem>>, vector<2x8xf32>
    %9 = vector.shape_cast %8 : vector<2x8xf32> to vector<2x8x1xf32>
    %10 = vector.broadcast %9 : vector<2x8x1xf32> to vector<2x8x32xf32>
    %11 = arith.mulf %7, %10 : vector<2x8x32xf32>
    %cst_9 = arith.constant dense<0.000000e+00> : vector<2x32xf32>
    %12 = vector.multi_reduction <add>, %11, %cst_9 [1] : vector<2x8x32xf32> to vector<2x32xf32>
    %c0_10 = arith.constant 0 : index
    %c0_11 = arith.constant 0 : index
    %13 = vector.load %arg5[%c0_10, %c0_11] : memref<2x32xf32, #tpu.memory_space<vmem>>, vector<2x32xf32>
    tpu.vector_store %arg5[%c0_10, %c0_11], %12 {strides = array<i32>} : memref<2x32xf32, #tpu.memory_space<vmem>>, vector<2x32xf32>,
    return
  }
}

</mosaic_0001>

<llo_original>
// kernel: tpu_custom_call.1
$region0: #{tpu_custom_call.1}
  #allocation0 [shape = 'u32[]', space=smem, size = 0x4, offset = 0x4, fixed_abs, tag = 'smem constant byte address 0x4 - core index']
  #allocation1 [shape = 'u32[144,128]{1,0:T(1,128)}', space=vmem, size = 0x12000, scoped, tag = 'internal scratch']
  %s0 = inlined_call_operand.hbm [shape: bf16[16,16], index: 0, kind: input, shape index: {}]
  %s1 = inlined_call_operand.hbm [shape: bf16[16,32], index: 1, kind: input, shape index: {}]
  %s2 = inlined_call_operand.vmem [shape: f32[1,32], index: 2, kind: input, shape index: {}]
  %s3 = inlined_call_operand.vmem [shape: f32[2,8], index: 3, kind: input, shape index: {}]
  %s4 = inlined_call_operand.hbm [shape: f32[16,32], index: 4, kind: output, shape index: {0}]
  %s5 = inlined_call_operand.hbm [shape: f32[2,32], index: 5, kind: output, shape index: {1}]
  %6 = xla_tuple %s4, %s5
  %s7 = sld [smem:[#allocation0]]
  $region42: #{tpu_custom_call.1} parent=0
    _
  %s9 = ssub.s32 1, %s7
  %s10 = scalar_select 0, %s9, %s7
  $region1: #{tpu_custom_call.1} parent=0
    #allocation2 [shape = 'u8[4096]{0}', space=vmem, size = 0x1000, scoped, tag = 'input window, operand 0, single buffered']
    #allocation3 [shape = 's32[1]{0}', space=sflag, size = 0x4, scoped, tag = 'scoped memory for tpu_custom_call.1']
    #allocation4 [shape = 's32[1]{0}', space=sflag, size = 0x4, scoped, tag = 'scoped memory for tpu_custom_call.1']
    #allocation5 [shape = 'u8[4096]{0}', space=vmem, size = 0x1000, scoped, tag = 'input window, operand 1, single buffered']
    #allocation6 [shape = 's32[1]{0}', space=sflag, size = 0x4, scoped, tag = 'scoped memory for tpu_custom_call.1']
    #allocation7 [shape = 'u8[8192]{0}', space=vmem, size = 0x2000, scoped, tag = 'output window, operand 0, single buffered']
    #allocation8 [shape = 'u8[1024]{0}', space=vmem, size = 0x400, scoped, tag = 'output window, operand 1, single buffered']
    #allocation9 [shape = 's32[1]{0}', space=sflag, size = 0x4, scoped, tag = 'scoped memory for tpu_custom_call.1']
    %11 = vsyncpa [#allocation3], 0
    %12 = vsyncpa [#allocation6], 0
    %13 = vsyncpa [#allocation4], 0
    %14 = vsyncpa [#allocation9], 0
    // Predicated region
    $region2: #{tpu_custom_call.1} parent=1 // pred_check
      _
    $region3: #{tpu_custom_call.1} parent=1 // pred_check_branch
      %16 = sbr.rel (0) target = $region5
    $region4: #{tpu_custom_call.1} parent=1 // pred_region
      %s18 = ssub.s32 128, 128
      %19 = vsyncadd [#allocation3], %s18
      %s20 = sshll.u32 [#allocation2], 4
      %s21 = int_to_ptr.vmem [resolvable:$true] %s20
      %26 = dma.hbm_to_vmem [thread:$0]  %s0, 128, %s21, [#allocation3], 64, 64, 4
    $region5: #{tpu_custom_call.1} parent=1 // pred_fallthru
      _
    // Predicated region
    $region6: #{tpu_custom_call.1} parent=1 // pred_check
      _
    $region7: #{tpu_custom_call.1} parent=1 // pred_check_branch
      %28 = sbr.rel (0) target = $region9
    $region8: #{tpu_custom_call.1} parent=1 // pred_region
      %s30 = ssub.s32 128, 128
      %31 = vsyncadd [#allocation6], %s30
      %s32 = sshll.u32 [#allocation5], 4
      %s33 = int_to_ptr.vmem [resolvable:$true] %s32
      %38 = dma.hbm_to_vmem [thread:$0]  %s1, 128, %s33, [#allocation6], 64, 64, 4
    $region9: #{tpu_custom_call.1} parent=1 // pred_fallthru
      _
    // Predicated region
    $region10: #{tpu_custom_call.1} parent=1 // pred_check
      _
    $region11: #{tpu_custom_call.1} parent=1 // pred_check_branch
      %40 = sbr.rel (0) target = $region13
    $region12: #{tpu_custom_call.1} parent=1 // pred_region
      _
    $region13: #{tpu_custom_call.1} parent=1 // pred_fallthru
      _
    // Predicated region
    $region14: #{tpu_custom_call.1} parent=1 // pred_check
      _
    $region15: #{tpu_custom_call.1} parent=1 // pred_check_branch
      %42 = sbr.rel (0) target = $region17
    $region16: #{tpu_custom_call.1} parent=1 // pred_region
      _
    $region17: #{tpu_custom_call.1} parent=1 // pred_fallthru
      _
    // Predicated region
    $region18: #{tpu_custom_call.1} parent=1 // pred_check
      _
    $region19: #{tpu_custom_call.1} parent=1 // pred_check_branch
      %44 = sbr.rel (0) target = $region21
    $region20: #{tpu_custom_call.1} parent=1 // pred_region
      %45 = dma.done [#allocation3], 128
    $region21: #{tpu_custom_call.1} parent=1 // pred_fallthru
      _
    // Predicated region
    $region22: #{tpu_custom_call.1} parent=1 // pred_check
      _
    $region23: #{tpu_custom_call.1} parent=1 // pred_check_branch
      %47 = sbr.rel (0) target = $region25
    $region24: #{tpu_custom_call.1} parent=1 // pred_region
      %48 = dma.done [#allocation6], 128
    $region25: #{tpu_custom_call.1} parent=1 // pred_fallthru
      _
    %v50 = vld [vmem:[#allocation2] sm:$0xf]
    %v51 = vld [vmem:[#allocation2 + $0x4] sm:$0xf]
    %v52 = vld [vmem:[#allocation5] sm:$0xf]
    %v53 = vld [vmem:[#allocation5 + $0x4] sm:$0xf]
    %v54 = vld [vmem:[%s2] sm:$0x1]
    %v56 = vlaneseq
    %v57 = vshrl.u32 %v56, 7
    %v58 = vsub.s32 0, %v57
    %v59 = vrot.slane %v54, %v58
    %v63 = vunpack.c.l.b16 %v50
    %v64 = vunpack.c.l.b16 %v51
    %v65 = vpack.c.b16 %v64, %v63
    %v68 = vunpack.c.l.b16 %v52
    %v69 = vunpack.c.l.b16 %v53
    %v70 = vpack.c.b16 %v69, %v68
    %vm72 = vcmask 130048
    %v74 = vsel %vm72, %v65, 0
    %76 = vmatprep.subr.bf16.mxu0 0
    %77 = vmatpush1.bf16.msra.mxu0 %v70
    %78 = vmatprep.subr.bf16.mxu0 0
    %79 = vmatpush1.bf16.msra.mxu0 0
    %80 = vmatprep.subr.bf16.mxu0 0
    %81 = vmatpush1.bf16.msra.mxu0 0
    %82 = vmatprep.subr.bf16.mxu0 0
    %83 = vmatpush1.bf16.msra.mxu0 0
    %84 = vmatprep.subr.bf16.mxu0 0
    %85 = vmatpush1.bf16.msra.mxu0 0
    %86 = vmatprep.subr.bf16.mxu0 0
    %87 = vmatpush1.bf16.msra.mxu0 0
    %88 = vmatprep.subr.bf16.mxu0 0
    %89 = vmatpush1.bf16.msra.mxu0 0
    %90 = vmatprep.subr.bf16.mxu0 0
    %91 = vmatpush1.bf16.msra.mxu0 0
    %92 = vmatprep.subr.bf16.mxu0 0
    %93 = vmatpush1.bf16.msra.mxu0 0
    %94 = vmatprep.subr.bf16.mxu0 0
    %95 = vmatpush1.bf16.msra.mxu0 0
    %96 = vmatprep.subr.bf16.mxu0 0
    %97 = vmatpush1.bf16.msra.mxu0 0
    %98 = vmatprep.subr.bf16.mxu0 0
    %99 = vmatpush1.bf16.msra.mxu0 0
    %100 = vmatprep.subr.bf16.mxu0 0
    %101 = vmatpush1.bf16.msra.mxu0 0
    %102 = vmatprep.subr.bf16.mxu0 0
    %103 = vmatpush1.bf16.msra.mxu0 0
    %104 = vmatprep.subr.bf16.mxu0 0
    %105 = vmatpush1.bf16.msra.mxu0 0
    %106 = vmatprep.subr.bf16.mxu0 0
    %107 = vmatpush1.bf16.msra.mxu0 0
    %108 = vmatprep.mubr.bf16.mxu0 0
    %109 = vmatmul.mubr.bf16.gmra.mrb[0].mxu0 %v74
    %v110 = vpop.f32.mrb[0].mxu0
    %v111 = vadd.f32 %v59, %v110
    %v112 = vpop.f32.mrb[0].mxu0
    %v113 = vpop.f32.mrb[0].mxu0
    %v114 = vadd.f32 %v59, %v113
    %v115 = vpop.f32.mrb[0].mxu0
    %116 = vdwg.mxu0
    %vm117 = vcmask 261120
    %118 = vst.msk [vmem:[#allocation7] sm:$0xff] %vm117, %v111
    %119 = vst.msk [vmem:[#allocation7 + $0x8] sm:$0xff] %vm117, %v114
    %v120 = vld [vmem:[%s3] sm:$0x3]
    %v121 = vlaneseq
    %v122 = vshrl.u32 %v121, 7
    %v123 = vsub.s32 0, %v122
    %v124 = vrot.slane %v120, %v123
    %126 = vbcast.lane.b32.xlu0 %v124, 256
    %v127 = vpop.permute.xlu0 %126
    %v128 = vlaneseq
    %v129 = vshrl.u32 %v128, 7
    %v130 = vsub.s32 1, %v129
    %v131 = vrot.slane %v120, %v130
    %133 = vbcast.lane.b32.xlu0 %v131, 256
    %v134 = vpop.permute.xlu0 %133
    %v135 = vmul.f32 %v111, %v127
    %v136 = vmul.f32 %v114, %v134
    %v137 = vsel %vm117, %v135, 0.0
    %v138 = vrot.slane %v137, 4
    %v139 = vadd.f32 %v137, %v138
    %v140 = vrot.slane %v139, 2
    %v141 = vadd.f32 %v139, %v140
    %v142 = vrot.slane %v141, 1
    %v143 = vadd.f32 %v141, %v142
    %v144 = vsel %vm117, %v136, 0.0
    %v145 = vrot.slane %v144, 4
    %v146 = vadd.f32 %v144, %v145
    %v147 = vrot.slane %v146, 2
    %v148 = vadd.f32 %v146, %v147
    %v149 = vrot.slane %v148, 1
    %v150 = vadd.f32 %v148, %v149
    %vm153 = vcmask 1041409
    %v154 = vsel %vm153, %v150, %v143
    %vm156 = vcmask 254976
    %157 = vst.msk [vmem:[#allocation8] sm:$0x3] %vm156, %v154
    // Predicated region
    $region26: #{tpu_custom_call.1} parent=1 // pred_check
      _
    $region27: #{tpu_custom_call.1} parent=1 // pred_check_branch
      %159 = sbr.rel (0) target = $region29
    $region28: #{tpu_custom_call.1} parent=1 // pred_region
      %s161 = ssub.s32 256, 256
      %162 = vsyncadd [#allocation4], %s161
      %s163 = sshll.u32 [#allocation7], 4
      %s164 = int_to_ptr.vmem [resolvable:$true] %s163
      %169 = dma.vmem_to_hbm [thread:$0]  %s164, 256, %s4, [#allocation4], 128, 128, 8
    $region29: #{tpu_custom_call.1} parent=1 // pred_fallthru
      _
    // Predicated region
    $region30: #{tpu_custom_call.1} parent=1 // pred_check
      _
    $region31: #{tpu_custom_call.1} parent=1 // pred_check_branch
      %171 = sbr.rel (0) target = $region33
    $region32: #{tpu_custom_call.1} parent=1 // pred_region
      %s173 = ssub.s32 32, 32
      %174 = vsyncadd [#allocation9], %s173
      %s176 = sshll.u32 [#allocation8], 4
      %s177 = int_to_ptr.vmem [resolvable:$true] %s176
      %179 = dma.vmem_to_hbm [thread:$0]  %s177, 32, %s5, [#allocation9]
    $region33: #{tpu_custom_call.1} parent=1 // pred_fallthru
      _
    // Predicated region
    $region34: #{tpu_custom_call.1} parent=1 // pred_check
      _
    $region35: #{tpu_custom_call.1} parent=1 // pred_check_branch
      %181 = sbr.rel (0) target = $region37
    $region36: #{tpu_custom_call.1} parent=1 // pred_region
      %182 = dma.done [#allocation4], 256
    $region37: #{tpu_custom_call.1} parent=1 // pred_fallthru
      _
    // Predicated region
    $region38: #{tpu_custom_call.1} parent=1 // pred_check
      _
    $region39: #{tpu_custom_call.1} parent=1 // pred_check_branch
      %184 = sbr.rel (0) target = $region41
    $region40: #{tpu_custom_call.1} parent=1 // pred_region
      %185 = dma.done [#allocation9], 32
    $region41: #{tpu_custom_call.1} parent=1 // pred_fallthru
      _
    %186 = vsyncpa [#allocation3], 1
    %187 = vsyncpa [#allocation6], 1
    %188 = vsyncpa [#allocation4], 1
    %189 = vsyncpa [#allocation9], 1

</llo_original>
